<compile_context>
chip_gen: v7x
topology: tpu7x:2x2x1
jax: 0.10.0
libtpu: 0.0.40
codegen_flags: <defaults>
</compile_context>

<pallas_src>
import functools

import jax
import jax.numpy as jnp
from jax import lax
from jax.experimental import pallas as pl
from jax.experimental.pallas import tpu as pltpu


def _round_up(x, m):
    return ((x + m - 1) // m) * m


def rnn_fc_kernel(tok_ref, emb_ref, wih_ref, whh_ref, b_ref, fcw_ref, fcb_ref,
                  out_ref, *, seq_len, batch, vocab):
    """h_t = tanh(x_t @ Wih + b + h_{t-1} @ Whh); out = h_T @ Wfc + b_fc.

    tok_ref: (T*B, 1)   int32 time-major token ids (batch padded to 8)
    emb_ref: (V, F)     bf16 embedding table (padded, lane-dense)
    wih_ref: (F, H)     bf16  = W_ih.T (padded)
    whh_ref: (H, H)     f32   = W_hh.T (padded)
    b_ref:   (1, H)     f32   = b_ih + b_hh (padded)
    fcw_ref: (H, C)     f32   = fc.weight.T (padded)
    fcb_ref: (1, C)     f32   = fc.bias (padded)
    out_ref: (B, C)     f32 logits (padded, lane-dense; sliced in the wrapper)
    """
    tb = seq_len * batch

    # ---- In-kernel embedding gather as a one-hot MXU matmul (no HBM activations). ----
    tok = tok_ref[...]                                                # (TB, 1) int32
    word_ids = lax.broadcasted_iota(jnp.int32, (tb, vocab), 1)        # (TB, V)
    one_hot = (word_ids == tok).astype(jnp.bfloat16)                  # exact 0/1
    x = jnp.dot(one_hot, emb_ref[...],
                preferred_element_type=jnp.float32).astype(jnp.bfloat16)   # (TB, F) bf16
    # TODO(synk): eval-mode dropout == identity here; training-mode dropout would use
    #             pltpu.prng_seed / pltpu.prng_random_bits on x.

    # ---- Hoisted input projection + fused bias for ALL timesteps (one bf16 MXU op). ----
    # Result stays in vregs: (TB, H) f32 = 8 vregs at these shapes, no VMEM scratch.
    pre = jnp.dot(x, wih_ref[...], preferred_element_type=jnp.float32) + b_ref[...]

    # W_hh read once; stays live in vregs across the recurrence so the MXU RHS push is
    # hoisted out of the unrolled loop.
    whh = whh_ref[...]
    h = jnp.zeros((batch, whh.shape[0]), jnp.float32)

    # Fully unrolled recurrence (T small & static). Each slice of `pre` starts at a
    # multiple of 8 sublanes (batch padded to 8) => whole-vreg slices, no masked loads.
    # TODO(synk): for large T, switch to lax.fori_loop over (T, B, H) chunks to bound
    #             vreg live ranges and compile time.
    for t in range(seq_len):
        pre_t = pre[t * batch:(t + 1) * batch, :]                     # (B, H) f32
        h = jnp.tanh(pre_t + jnp.dot(h, whh, preferred_element_type=jnp.float32))

    # Final classifier in f32 (once, off the critical path); lane-dense (B, 128) store.
    out_ref[...] = (jnp.dot(h, fcw_ref[...], preferred_element_type=jnp.float32)
                    + fcb_ref[...]).astype(out_ref.dtype)


def my_rnn_forward(tokens, emb_w, w_ih, w_hh, b_ih, b_hh, fc_w, fc_b):
    """Full forward: tokens (B, T) int32 -> logits (B, C)."""
    B, T = tokens.shape
    V, F = emb_w.shape
    H = w_ih.shape[0]
    C = fc_w.shape[0]

    # Lane/sublane-dense padded sizes.
    B_pad = _round_up(B, 8)
    V_pad = _round_up(V, 128)
    F_pad = _round_up(F, 128)
    H_pad = _round_up(H, 128)
    C_pad = _round_up(C, 128)

    def pad2(a, rows, cols):
        return jnp.pad(a, ((0, rows - a.shape[0]), (0, cols - a.shape[1])))

    # Time-major tokens, batch padded to a full sublane group, as (T*B_pad, 1) int32.
    tok_tm = jnp.pad(tokens.T.astype(jnp.int32), ((0, 0), (0, B_pad - B)))
    tok_2d = tok_tm.reshape(T * B_pad, 1)

    # Zero padding keeps the math exact: padded hidden/logit columns stay identically 0.
    emb_pad = pad2(emb_w, V_pad, F_pad).astype(jnp.bfloat16)          # gather + proj in bf16
    wih_pad = pad2(w_ih.T, F_pad, H_pad).astype(jnp.bfloat16)
    whh_pad = pad2(w_hh.T, H_pad, H_pad).astype(jnp.float32)          # recurrence stays f32
    b_pad = pad2((b_ih + b_hh).reshape(1, H), 1, H_pad).astype(jnp.float32)
    fcw_pad = pad2(fc_w.T, H_pad, C_pad).astype(jnp.float32)
    fcb_pad = pad2(fc_b.reshape(1, C), 1, C_pad).astype(jnp.float32)

    kernel = functools.partial(rnn_fc_kernel, seq_len=T, batch=B_pad, vocab=V_pad)

    out_pad = pl.pallas_call(
        kernel,
        out_shape=jax.ShapeDtypeStruct((B_pad, C_pad), jnp.float32),
        in_specs=[pl.BlockSpec(memory_space=pltpu.MemorySpace.VMEM)] * 7,
        out_specs=pl.BlockSpec(memory_space=pltpu.MemorySpace.VMEM),
    )(tok_2d, emb_pad, wih_pad, whh_pad, b_pad, fcw_pad, fcb_pad)

    return out_pad[:B, :C]


def reference_forward(tokens, emb_w, w_ih, w_hh, b_ih, b_hh, fc_w, fc_b):
    """Pure-JAX f32 reference matching torch.nn.RNN(batch_first=True) semantics."""
    emb = emb_w[tokens]                          # (B, T, F)
    B, T, _ = emb.shape
    H = w_ih.shape[0]
    h = jnp.zeros((B, H), jnp.float32)
    for t in range(T):
        h = jnp.tanh(emb[:, t, :] @ w_ih.T + b_ih + h @ w_hh.T + b_hh)
    return h @ fc_w.T + fc_b


if __name__ == "__main__":
    # Small shapes consistent with the module's __init__.
    len_words, len_feature, len_hidden, typenum = 50, 32, 32, 5
    batch, seq = 4, 8

    key = jax.random.PRNGKey(0)
    k_tok, k_emb, k_wih, k_whh, k_bih, k_bhh, k_fcw, k_fcb = jax.random.split(key, 8)

    # Deterministic parameter init (mirroring PyTorch init schemes):
    emb_std = (2.0 / (len_words + len_feature)) ** 0.5       # xavier_normal_
    emb_w = emb_std * jax.random.normal(k_emb, (len_words, len_feature), jnp.float32)
    bound = 1.0 / (len_hidden ** 0.5)                        # uniform(-1/sqrt(H), 1/sqrt(H))
    w_ih = jax.random.uniform(k_wih, (len_hidden, len_feature), jnp.float32, -bound, bound)
    w_hh = jax.random.uniform(k_whh, (len_hidden, len_hidden), jnp.float32, -bound, bound)
    b_ih = jax.random.uniform(k_bih, (len_hidden,), jnp.float32, -bound, bound)
    b_hh = jax.random.uniform(k_bhh, (len_hidden,), jnp.float32, -bound, bound)
    fc_w = jax.random.uniform(k_fcw, (typenum, len_hidden), jnp.float32, -bound, bound)
    fc_b = jax.random.uniform(k_fcb, (typenum,), jnp.float32, -bound, bound)

    tokens = jax.random.randint(k_tok, (batch, seq), 0, len_words, jnp.int32)

    out = my_rnn_forward(tokens, emb_w, w_ih, w_hh, b_ih, b_hh, fc_w, fc_b)
    out = jax.block_until_ready(out)

    ref = reference_forward(tokens, emb_w, w_ih, w_hh, b_ih, b_hh, fc_w, fc_b)
    assert out.shape == (batch, typenum), out.shape
    # Tolerance budget: embedding table and W_ih are fed to the MXU in bf16 (f32
    # accumulation, f32 hidden state/recurrence/FC), giving ~1e-3 worst-case logit drift
    # vs. the pure-f32 reference.
    assert jnp.allclose(out, ref, atol=5e-3, rtol=5e-3), (out, ref)

    print("KERNEL_OK")
</pallas_src>

<mosaic_0001>
module attributes {stable_mosaic.version = 11 : i64} {
  func.func @rnn_fc_kernel(%arg0: memref<64x1xi32, #tpu.memory_space<vmem>>, %arg1: memref<128x128xbf16, #tpu.memory_space<vmem>>, %arg2: memref<128x128xbf16, #tpu.memory_space<vmem>>, %arg3: memref<128x128xf32, #tpu.memory_space<vmem>>, %arg4: memref<1x128xf32, #tpu.memory_space<vmem>>, %arg5: memref<128x128xf32, #tpu.memory_space<vmem>>, %arg6: memref<1x128xf32, #tpu.memory_space<vmem>>, %arg7: memref<8x128xf32, #tpu.memory_space<vmem>>) attributes {dimension_semantics = [], scalar_prefetch = 0 : i64, scratch_operands = 0 : i64, tpu.core_type = #tpu.core_type<tc>} {
    %c0 = arith.constant 0 : index
    %c0_0 = arith.constant 0 : index
    %0 = vector.load %arg0[%c0, %c0_0] : memref<64x1xi32, #tpu.memory_space<vmem>>, vector<64x1xi32>
    %1 = tpu.iota {dimensions = array<i32: 1>} : vector<64x128xi32>
    %2 = vector.broadcast %0 : vector<64x1xi32> to vector<64x128xi32>
    %3 = arith.cmpi eq, %1, %2 : vector<64x128xi32>
    %4 = arith.extui %3 : vector<64x128xi1> to vector<64x128xi32>
    %5 = arith.sitofp %4 : vector<64x128xi32> to vector<64x128xf32>
    %6 = arith.truncf %5 : vector<64x128xf32> to vector<64x128xbf16>
    %c0_1 = arith.constant 0 : index
    %c0_2 = arith.constant 0 : index
    %7 = vector.load %arg1[%c0_1, %c0_2] : memref<128x128xbf16, #tpu.memory_space<vmem>>, vector<128x128xbf16>
    %cst = arith.constant dense<0.000000e+00> : vector<64x128xf32>
    %8 = tpu.matmul %6, %7, %cst {dimension_numbers = #tpu.dot_dimension_numbers<[1], [0], [0], [1], [0, 0, 1, 1], [], []>} : vector<64x128xbf16>, vector<128x128xbf16>, vector<64x128xf32> -> vector<64x128xf32>
    %9 = arith.truncf %8 : vector<64x128xf32> to vector<64x128xbf16>
    %c0_3 = arith.constant 0 : index
    %c0_4 = arith.constant 0 : index
    %10 = vector.load %arg2[%c0_3, %c0_4] : memref<128x128xbf16, #tpu.memory_space<vmem>>, vector<128x128xbf16>
    %cst_5 = arith.constant dense<0.000000e+00> : vector<64x128xf32>
    %11 = tpu.matmul %9, %10, %cst_5 {dimension_numbers = #tpu.dot_dimension_numbers<[1], [0], [0], [1], [0, 0, 1, 1], [], []>} : vector<64x128xbf16>, vector<128x128xbf16>, vector<64x128xf32> -> vector<64x128xf32>
    %c0_6 = arith.constant 0 : index
    %c0_7 = arith.constant 0 : index
    %12 = vector.load %arg4[%c0_6, %c0_7] : memref<1x128xf32, #tpu.memory_space<vmem>>, vector<1x128xf32>
    %13 = vector.broadcast %12 : vector<1x128xf32> to vector<64x128xf32>
    %14 = arith.addf %11, %13 : vector<64x128xf32>
    %c0_8 = arith.constant 0 : index
    %c0_9 = arith.constant 0 : index
    %15 = vector.load %arg3[%c0_8, %c0_9] : memref<128x128xf32, #tpu.memory_space<vmem>>, vector<128x128xf32>
    %cst_10 = arith.constant 0.000000e+00 : f32
    %16 = vector.broadcast %cst_10 : f32 to vector<8x128xf32>
    %17 = vector.extract_strided_slice %14 {offsets = [0, 0], sizes = [8, 128], strides = [1, 1]} : vector<64x128xf32> to vector<8x128xf32>
    %cst_11 = arith.constant dense<0.000000e+00> : vector<8x128xf32>
    %18 = tpu.matmul %16, %15, %cst_11 {dimension_numbers = #tpu.dot_dimension_numbers<[1], [0], [0], [1], [0, 0, 1, 1], [], []>} : vector<8x128xf32>, vector<128x128xf32>, vector<8x128xf32> -> vector<8x128xf32>
    %19 = arith.addf %17, %18 : vector<8x128xf32>
    %20 = math.tanh %19 : vector<8x128xf32>
    %21 = vector.extract_strided_slice %14 {offsets = [8, 0], sizes = [8, 128], strides = [1, 1]} : vector<64x128xf32> to vector<8x128xf32>
    %cst_12 = arith.constant dense<0.000000e+00> : vector<8x128xf32>
    %22 = tpu.matmul %20, %15, %cst_12 {dimension_numbers = #tpu.dot_dimension_numbers<[1], [0], [0], [1], [0, 0, 1, 1], [], []>} : vector<8x128xf32>, vector<128x128xf32>, vector<8x128xf32> -> vector<8x128xf32>
    %23 = arith.addf %21, %22 : vector<8x128xf32>
    %24 = math.tanh %23 : vector<8x128xf32>
    %25 = vector.extract_strided_slice %14 {offsets = [16, 0], sizes = [8, 128], strides = [1, 1]} : vector<64x128xf32> to vector<8x128xf32>
    %cst_13 = arith.constant dense<0.000000e+00> : vector<8x128xf32>
    %26 = tpu.matmul %24, %15, %cst_13 {dimension_numbers = #tpu.dot_dimension_numbers<[1], [0], [0], [1], [0, 0, 1, 1], [], []>} : vector<8x128xf32>, vector<128x128xf32>, vector<8x128xf32> -> vector<8x128xf32>
    %27 = arith.addf %25, %26 : vector<8x128xf32>
    %28 = math.tanh %27 : vector<8x128xf32>
    %29 = vector.extract_strided_slice %14 {offsets = [24, 0], sizes = [8, 128], strides = [1, 1]} : vector<64x128xf32> to vector<8x128xf32>
    %cst_14 = arith.constant dense<0.000000e+00> : vector<8x128xf32>
    %30 = tpu.matmul %28, %15, %cst_14 {dimension_numbers = #tpu.dot_dimension_numbers<[1], [0], [0], [1], [0, 0, 1, 1], [], []>} : vector<8x128xf32>, vector<128x128xf32>, vector<8x128xf32> -> vector<8x128xf32>
    %31 = arith.addf %29, %30 : vector<8x128xf32>
    %32 = math.tanh %31 : vector<8x128xf32>
    %33 = vector.extract_strided_slice %14 {offsets = [32, 0], sizes = [8, 128], strides = [1, 1]} : vector<64x128xf32> to vector<8x128xf32>
    %cst_15 = arith.constant dense<0.000000e+00> : vector<8x128xf32>
    %34 = tpu.matmul %32, %15, %cst_15 {dimension_numbers = #tpu.dot_dimension_numbers<[1], [0], [0], [1], [0, 0, 1, 1], [], []>} : vector<8x128xf32>, vector<128x128xf32>, vector<8x128xf32> -> vector<8x128xf32>
    %35 = arith.addf %33, %34 : vector<8x128xf32>
    %36 = math.tanh %35 : vector<8x128xf32>
    %37 = vector.extract_strided_slice %14 {offsets = [40, 0], sizes = [8, 128], strides = [1, 1]} : vector<64x128xf32> to vector<8x128xf32>
    %cst_16 = arith.constant dense<0.000000e+00> : vector<8x128xf32>
    %38 = tpu.matmul %36, %15, %cst_16 {dimension_numbers = #tpu.dot_dimension_numbers<[1], [0], [0], [1], [0, 0, 1, 1], [], []>} : vector<8x128xf32>, vector<128x128xf32>, vector<8x128xf32> -> vector<8x128xf32>
    %39 = arith.addf %37, %38 : vector<8x128xf32>
    %40 = math.tanh %39 : vector<8x128xf32>
    %41 = vector.extract_strided_slice %14 {offsets = [48, 0], sizes = [8, 128], strides = [1, 1]} : vector<64x128xf32> to vector<8x128xf32>
    %cst_17 = arith.constant dense<0.000000e+00> : vector<8x128xf32>
    %42 = tpu.matmul %40, %15, %cst_17 {dimension_numbers = #tpu.dot_dimension_numbers<[1], [0], [0], [1], [0, 0, 1, 1], [], []>} : vector<8x128xf32>, vector<128x128xf32>, vector<8x128xf32> -> vector<8x128xf32>
    %43 = arith.addf %41, %42 : vector<8x128xf32>
    %44 = math.tanh %43 : vector<8x128xf32>
    %45 = vector.extract_strided_slice %14 {offsets = [56, 0], sizes = [8, 128], strides = [1, 1]} : vector<64x128xf32> to vector<8x128xf32>
    %cst_18 = arith.constant dense<0.000000e+00> : vector<8x128xf32>
    %46 = tpu.matmul %44, %15, %cst_18 {dimension_numbers = #tpu.dot_dimension_numbers<[1], [0], [0], [1], [0, 0, 1, 1], [], []>} : vector<8x128xf32>, vector<128x128xf32>, vector<8x128xf32> -> vector<8x128xf32>
    %47 = arith.addf %45, %46 : vector<8x128xf32>
    %48 = math.tanh %47 : vector<8x128xf32>
    %c0_19 = arith.constant 0 : index
    %c0_20 = arith.constant 0 : index
    %49 = vector.load %arg5[%c0_19, %c0_20] : memref<128x128xf32, #tpu.memory_space<vmem>>, vector<128x128xf32>
    %cst_21 = arith.constant dense<0.000000e+00> : vector<8x128xf32>
    %50 = tpu.matmul %48, %49, %cst_21 {dimension_numbers = #tpu.dot_dimension_numbers<[1], [0], [0], [1], [0, 0, 1, 1], [], []>} : vector<8x128xf32>, vector<128x128xf32>, vector<8x128xf32> -> vector<8x128xf32>
    %c0_22 = arith.constant 0 : index
    %c0_23 = arith.constant 0 : index
    %51 = vector.load %arg6[%c0_22, %c0_23] : memref<1x128xf32, #tpu.memory_space<vmem>>, vector<1x128xf32>
    %52 = vector.broadcast %51 : vector<1x128xf32> to vector<8x128xf32>
    %53 = arith.addf %50, %52 : vector<8x128xf32>
    %c0_24 = arith.constant 0 : index
    %c0_25 = arith.constant 0 : index
    %54 = vector.load %arg7[%c0_24, %c0_25] : memref<8x128xf32, #tpu.memory_space<vmem>>, vector<8x128xf32>
    tpu.vector_store %arg7[%c0_24, %c0_25], %53 {strides = array<i32>} : memref<8x128xf32, #tpu.memory_space<vmem>>, vector<8x128xf32>,
    return
  }
}

</mosaic_0001>

<llo_original>
// kernel: tpu_custom_call.1
$region0: #{tpu_custom_call.1}
  #allocation0 [shape = 'u32[]', space=smem, size = 0x4, offset = 0x4, fixed_abs, tag = 'smem constant byte address 0x4 - core index']
  #allocation1 [shape = 'u32[144,128]{1,0:T(1,128)}', space=vmem, size = 0x12000, scoped, tag = 'internal scratch']
  %s0 = inlined_call_operand.vmem [shape: s32[64,1], index: 0, kind: input, shape index: {}]
  %s1 = inlined_call_operand.vmem [shape: bf16[128,128], index: 1, kind: input, shape index: {}]
  %s2 = inlined_call_operand.hbm [shape: bf16[128,128], index: 2, kind: input, shape index: {}]
  %s3 = inlined_call_operand.hbm [shape: f32[128,128], index: 3, kind: input, shape index: {}]
  %s4 = inlined_call_operand.vmem [shape: f32[1,128], index: 4, kind: input, shape index: {}]
  %s5 = inlined_call_operand.hbm [shape: f32[128,128], index: 5, kind: input, shape index: {}]
  %s6 = inlined_call_operand.vmem [shape: f32[1,128], index: 6, kind: input, shape index: {}]
  %s7 = inlined_call_operand.hbm [shape: f32[8,128], index: 7, kind: output, shape index: {}]
  %s8 = sld [smem:[#allocation0]]
  $region50: #{tpu_custom_call.1} parent=0
    _
  %s10 = ssub.s32 1, %s8
  %s11 = scalar_select 0, %s10, %s8
  $region1: #{tpu_custom_call.1} parent=0
    #allocation2 [shape = 'u8[32768]{0}', space=vmem, size = 0x8000, scoped, tag = 'input window, operand 2, single buffered']
    #allocation3 [shape = 's32[1]{0}', space=sflag, size = 0x4, scoped, tag = 'scoped memory for tpu_custom_call.1']
    #allocation4 [shape = 's32[1]{0}', space=sflag, size = 0x4, scoped, tag = 'scoped memory for tpu_custom_call.1']
    #allocation5 [shape = 'u8[65536]{0}', space=vmem, size = 0x10000, scoped, tag = 'input window, operand 3, single buffered']
    #allocation6 [shape = 's32[1]{0}', space=sflag, size = 0x4, scoped, tag = 'scoped memory for tpu_custom_call.1']
    #allocation7 [shape = 'u8[65536]{0}', space=vmem, size = 0x10000, scoped, tag = 'input window, operand 5, single buffered']
    #allocation8 [shape = 'u8[4096]{0}', space=vmem, size = 0x1000, scoped, tag = 'output window, operand 0, single buffered']
    %12 = vsyncpa [#allocation3], 0
    %13 = vsyncpa [#allocation6], 0
    %14 = vsyncpa [#allocation4], 0
    // Predicated region
    $region2: #{tpu_custom_call.1} parent=1 // pred_check
      _
    $region3: #{tpu_custom_call.1} parent=1 // pred_check_branch
      %16 = sbr.rel (0) target = $region5
    $region4: #{tpu_custom_call.1} parent=1 // pred_region
      _
    $region5: #{tpu_custom_call.1} parent=1 // pred_fallthru
      _
    // Predicated region
    $region6: #{tpu_custom_call.1} parent=1 // pred_check
      _
    $region7: #{tpu_custom_call.1} parent=1 // pred_check_branch
      %18 = sbr.rel (0) target = $region9
    $region8: #{tpu_custom_call.1} parent=1 // pred_region
      _
    $region9: #{tpu_custom_call.1} parent=1 // pred_fallthru
      _
    // Predicated region
    $region10: #{tpu_custom_call.1} parent=1 // pred_check
      _
    $region11: #{tpu_custom_call.1} parent=1 // pred_check_branch
      %20 = sbr.rel (0) target = $region13
    $region12: #{tpu_custom_call.1} parent=1 // pred_region
      %s22 = ssub.s32 1024, 1024
      %23 = vsyncadd [#allocation3], %s22
      %s24 = sshll.u32 [#allocation2], 4
      %s25 = int_to_ptr.vmem [resolvable:$true] %s24
      %30 = dma.hbm_to_vmem [thread:$0]  %s2, 1024, %s25, [#allocation3], 64, 64, 4
    $region13: #{tpu_custom_call.1} parent=1 // pred_fallthru
      _
    // Predicated region
    $region14: #{tpu_custom_call.1} parent=1 // pred_check
      _
    $region15: #{tpu_custom_call.1} parent=1 // pred_check_branch
      %32 = sbr.rel (0) target = $region17
    $region16: #{tpu_custom_call.1} parent=1 // pred_region
      %s34 = ssub.s32 2048, 2048
      %35 = vsyncadd [#allocation6], %s34
      %s36 = sshll.u32 [#allocation5], 4
      %s37 = int_to_ptr.vmem [resolvable:$true] %s36
      %42 = dma.hbm_to_vmem [thread:$0]  %s3, 2048, %s37, [#allocation6], 128, 128, 8
    $region17: #{tpu_custom_call.1} parent=1 // pred_fallthru
      _
    // Predicated region
    $region18: #{tpu_custom_call.1} parent=1 // pred_check
      _
    $region19: #{tpu_custom_call.1} parent=1 // pred_check_branch
      %44 = sbr.rel (0) target = $region21
    $region20: #{tpu_custom_call.1} parent=1 // pred_region
      _
    $region21: #{tpu_custom_call.1} parent=1 // pred_fallthru
      _
    // Predicated region
    $region22: #{tpu_custom_call.1} parent=1 // pred_check
      _
    $region23: #{tpu_custom_call.1} parent=1 // pred_check_branch
      %46 = sbr.rel (0) target = $region25
    $region24: #{tpu_custom_call.1} parent=1 // pred_region
      %s48 = ssub.s32 2048, 2048
      %49 = vsyncadd [#allocation6], %s48
      %s50 = sshll.u32 [#allocation7], 4
      %s51 = int_to_ptr.vmem [resolvable:$true] %s50
      %56 = dma.hbm_to_vmem [thread:$0]  %s5, 2048, %s51, [#allocation6], 128, 128, 8
    $region25: #{tpu_custom_call.1} parent=1 // pred_fallthru
      _
    // Predicated region
    $region26: #{tpu_custom_call.1} parent=1 // pred_check
      _
    $region27: #{tpu_custom_call.1} parent=1 // pred_check_branch
      %58 = sbr.rel (0) target = $region29
    $region28: #{tpu_custom_call.1} parent=1 // pred_region
      _
    $region29: #{tpu_custom_call.1} parent=1 // pred_fallthru
      _
    // Predicated region
    $region30: #{tpu_custom_call.1} parent=1 // pred_check
      _
    $region31: #{tpu_custom_call.1} parent=1 // pred_check_branch
      %60 = sbr.rel (0) target = $region33
    $region32: #{tpu_custom_call.1} parent=1 // pred_region
      %61 = dma.done [#allocation3], 1024
    $region33: #{tpu_custom_call.1} parent=1 // pred_fallthru
      _
    // Predicated region
    $region34: #{tpu_custom_call.1} parent=1 // pred_check
      _
    $region35: #{tpu_custom_call.1} parent=1 // pred_check_branch
      %63 = sbr.rel (0) target = $region37
    $region36: #{tpu_custom_call.1} parent=1 // pred_region
      %64 = dma.done [#allocation6], 2048
    $region37: #{tpu_custom_call.1} parent=1 // pred_fallthru
      _
    // Predicated region
    $region38: #{tpu_custom_call.1} parent=1 // pred_check
      _
    $region39: #{tpu_custom_call.1} parent=1 // pred_check_branch
      %66 = sbr.rel (0) target = $region41
    $region40: #{tpu_custom_call.1} parent=1 // pred_region
      %67 = dma.done [#allocation6], 2048
    $region41: #{tpu_custom_call.1} parent=1 // pred_fallthru
      _
    %v69 = vld [vmem:[%s0] sm:$0xff]
    %v70 = vld [vmem:[%s0 + $0x8] sm:$0xff]
    %v71 = vld [vmem:[%s0 + $0x10] sm:$0xff]
    %v72 = vld [vmem:[%s0 + $0x18] sm:$0xff]
    %v73 = vld [vmem:[%s0 + $0x20] sm:$0xff]
    %v74 = vld [vmem:[%s0 + $0x28] sm:$0xff]
    %v75 = vld [vmem:[%s0 + $0x30] sm:$0xff]
    %v76 = vld [vmem:[%s0 + $0x38] sm:$0xff]
    %v77 = vlaneseq
    %v78 = vand.u32 %v77, 127
    %79 = vset.pattern.permute.xlu0 0
    %80 = vperm.xlu0 %79, %v69
    %v81 = vpop.permute.xlu0 %80
    %82 = vset.pattern.permute.xlu0 0
    %83 = vperm.xlu0 %82, %v70
    %v84 = vpop.permute.xlu0 %83
    %85 = vset.pattern.permute.xlu0 0
    %86 = vperm.xlu0 %85, %v71
    %v87 = vpop.permute.xlu0 %86
    %88 = vset.pattern.permute.xlu0 0
    %89 = vperm.xlu0 %88, %v72
    %v90 = vpop.permute.xlu0 %89
    %91 = vset.pattern.permute.xlu0 0
    %92 = vperm.xlu0 %91, %v73
    %v93 = vpop.permute.xlu0 %92
    %94 = vset.pattern.permute.xlu0 0
    %95 = vperm.xlu0 %94, %v74
    %v96 = vpop.permute.xlu0 %95
    %97 = vset.pattern.permute.xlu0 0
    %98 = vperm.xlu0 %97, %v75
    %v99 = vpop.permute.xlu0 %98
    %100 = vset.pattern.permute.xlu0 0
    %101 = vperm.xlu0 %100, %v76
    %v102 = vpop.permute.xlu0 %101
    %vm103 = vcmp.eq.s32.totalorder %v78, %v81
    %vm104 = vcmp.eq.s32.totalorder %v78, %v84
    %vm105 = vcmp.eq.s32.totalorder %v78, %v87
    %vm106 = vcmp.eq.s32.totalorder %v78, %v90
    %vm107 = vcmp.eq.s32.totalorder %v78, %v93
    %vm108 = vcmp.eq.s32.totalorder %v78, %v96
    %vm109 = vcmp.eq.s32.totalorder %v78, %v99
    %vm110 = vcmp.eq.s32.totalorder %v78, %v102
    %v111 = vsel %vm103, 1, 0
    %v112 = vsel %vm104, 1, 0
    %v113 = vsel %vm105, 1, 0
    %v114 = vsel %vm106, 1, 0
    %v115 = vsel %vm107, 1, 0
    %v116 = vsel %vm108, 1, 0
    %v117 = vsel %vm109, 1, 0
    %v118 = vsel %vm110, 1, 0
    %v119 = vcvt.s32.f32 %v111
    %v120 = vcvt.s32.f32 %v112
    %v121 = vcvt.s32.f32 %v113
    %v122 = vcvt.s32.f32 %v114
    %v123 = vcvt.s32.f32 %v115
    %v124 = vcvt.s32.f32 %v116
    %v125 = vcvt.s32.f32 %v117
    %v126 = vcvt.s32.f32 %v118
    %v127 = vpack.c.bf16 %v120, %v119
    %v128 = vpack.c.bf16 %v122, %v121
    %v129 = vpack.c.bf16 %v124, %v123
    %v130 = vpack.c.bf16 %v126, %v125
    %v131 = vld [vmem:[%s1] sm:$0xf]
    %v132 = vld [vmem:[%s1 + $0x4] sm:$0xf]
    %v133 = vld [vmem:[%s1 + $0x8] sm:$0xf]
    %v134 = vld [vmem:[%s1 + $0xc] sm:$0xf]
    %v135 = vld [vmem:[%s1 + $0x10] sm:$0xf]
    %v136 = vld [vmem:[%s1 + $0x14] sm:$0xf]
    %v137 = vld [vmem:[%s1 + $0x18] sm:$0xf]
    %v138 = vld [vmem:[%s1 + $0x1c] sm:$0xf]
    %v139 = vld [vmem:[%s1 + $0x20] sm:$0xf]
    %v140 = vld [vmem:[%s1 + $0x24] sm:$0xf]
    %v141 = vld [vmem:[%s1 + $0x28] sm:$0xf]
    %v142 = vld [vmem:[%s1 + $0x2c] sm:$0xf]
    %v143 = vld [vmem:[%s1 + $0x30] sm:$0xf]
    %v144 = vld [vmem:[%s1 + $0x34] sm:$0xf]
    %v145 = vld [vmem:[%s1 + $0x38] sm:$0xf]
    %v146 = vld [vmem:[%s1 + $0x3c] sm:$0xf]
    %v163 = vunpack.c.l.b16 %v131
    %v164 = vunpack.c.l.b16 %v132
    %v165 = vunpack.c.l.b16 %v133
    %v166 = vunpack.c.l.b16 %v134
    %v167 = vunpack.c.l.b16 %v135
    %v168 = vunpack.c.l.b16 %v136
    %v169 = vunpack.c.l.b16 %v137
    %v170 = vunpack.c.l.b16 %v138
    %v171 = vunpack.c.l.b16 %v139
    %v172 = vunpack.c.l.b16 %v140
    %v173 = vunpack.c.l.b16 %v141
    %v174 = vunpack.c.l.b16 %v142
    %v175 = vunpack.c.l.b16 %v143
    %v176 = vunpack.c.l.b16 %v144
    %v177 = vunpack.c.l.b16 %v145
    %v178 = vunpack.c.l.b16 %v146
    %v179 = vpack.c.b16 %v164, %v163
    %v180 = vpack.c.b16 %v166, %v165
    %v181 = vpack.c.b16 %v168, %v167
    %v182 = vpack.c.b16 %v170, %v169
    %v183 = vpack.c.b16 %v172, %v171
    %v184 = vpack.c.b16 %v174, %v173
    %v185 = vpack.c.b16 %v176, %v175
    %v186 = vpack.c.b16 %v178, %v177
    %195 = vmatprep.subr.bf16.mxu0 0
    %196 = vmatpush1.bf16.msra.mxu0 %v179
    %197 = vmatprep.subr.bf16.mxu0 0
    %198 = vmatpush1.bf16.msra.mxu0 %v180
    %199 = vmatprep.subr.bf16.mxu0 0
    %200 = vmatpush1.bf16.msra.mxu0 %v181
    %201 = vmatprep.subr.bf16.mxu0 0
    %202 = vmatpush1.bf16.msra.mxu0 %v182
    %203 = vmatprep.subr.bf16.mxu0 0
    %204 = vmatpush1.bf16.msra.mxu0 %v183
    %205 = vmatprep.subr.bf16.mxu0 0
    %206 = vmatpush1.bf16.msra.mxu0 %v184
    %207 = vmatprep.subr.bf16.mxu0 0
    %208 = vmatpush1.bf16.msra.mxu0 %v185
    %209 = vmatprep.subr.bf16.mxu0 0
    %210 = vmatpush1.bf16.msra.mxu0 %v186
    %211 = vmatprep.subr.bf16.mxu0 0
    %212 = vmatpush1.bf16.msra.mxu0 0
    %213 = vmatprep.subr.bf16.mxu0 0
    %214 = vmatpush1.bf16.msra.mxu0 0
    %215 = vmatprep.subr.bf16.mxu0 0
    %216 = vmatpush1.bf16.msra.mxu0 0
    %217 = vmatprep.subr.bf16.mxu0 0
    %218 = vmatpush1.bf16.msra.mxu0 0
    %219 = vmatprep.subr.bf16.mxu0 0
    %220 = vmatpush1.bf16.msra.mxu0 0
    %221 = vmatprep.subr.bf16.mxu0 0
    %222 = vmatpush1.bf16.msra.mxu0 0
    %223 = vmatprep.subr.bf16.mxu0 0
    %224 = vmatpush1.bf16.msra.mxu0 0
    %225 = vmatprep.subr.bf16.mxu0 0
    %226 = vmatpush1.bf16.msra.mxu0 0
    %227 = vmatprep.mubr.bf16.mxu0 0
    %228 = vmatmul.mubr.bf16.gmra.mrb[0].mxu0 %v127
    %v229 = vpop.f32.mrb[0].mxu0
    %v230 = vadd.f32 0.0, %v229
    %v231 = vpop.f32.mrb[0].mxu0
    %v232 = vpop.f32.mrb[0].mxu0
    %v233 = vadd.f32 0.0, %v232
    %v234 = vpop.f32.mrb[0].mxu0
    %235 = vmatprep.mubr.bf16.mxu0 0
    %236 = vmatmul.mubr.bf16.gmra.mrb[0].mxu0 %v128
    %v237 = vpop.f32.mrb[0].mxu0
    %v238 = vadd.f32 0.0, %v237
    %v239 = vpop.f32.mrb[0].mxu0
    %v240 = vpop.f32.mrb[0].mxu0
    %v241 = vadd.f32 0.0, %v240
    %v242 = vpop.f32.mrb[0].mxu0
    %243 = vmatprep.mubr.bf16.mxu0 0
    %244 = vmatmul.mubr.bf16.gmra.mrb[0].mxu0 %v129
    %v245 = vpop.f32.mrb[0].mxu0
    %v246 = vadd.f32 0.0, %v245
    %v247 = vpop.f32.mrb[0].mxu0
    %v248 = vpop.f32.mrb[0].mxu0
    %v249 = vadd.f32 0.0, %v248
    %v250 = vpop.f32.mrb[0].mxu0
    %251 = vmatprep.mubr.bf16.mxu0 0
    %252 = vmatmul.mubr.bf16.gmra.mrb[0].mxu0 %v130
    %v253 = vpop.f32.mrb[0].mxu0
    %v254 = vadd.f32 0.0, %v253
    %v255 = vpop.f32.mrb[0].mxu0
    %v256 = vpop.f32.mrb[0].mxu0
    %v257 = vadd.f32 0.0, %v256
    %v258 = vpop.f32.mrb[0].mxu0
    %259 = vdwg.mxu0
    %v260 = vpack.c.bf16 %v233, %v230
    %v261 = vpack.c.bf16 %v241, %v238
    %v262 = vpack.c.bf16 %v249, %v246
    %v263 = vpack.c.bf16 %v257, %v254
    %v264 = vld [vmem:[#allocation2] sm:$0xf]
    %v265 = vld [vmem:[#allocation2 + $0x4] sm:$0xf]
    %v266 = vld [vmem:[#allocation2 + $0x8] sm:$0xf]
    %v267 = vld [vmem:[#allocation2 + $0xc] sm:$0xf]
    %v268 = vld [vmem:[#allocation2 + $0x10] sm:$0xf]
    %v269 = vld [vmem:[#allocation2 + $0x14] sm:$0xf]
    %v270 = vld [vmem:[#allocation2 + $0x18] sm:$0xf]
    %v271 = vld [vmem:[#allocation2 + $0x1c] sm:$0xf]
    %v272 = vld [vmem:[#allocation2 + $0x20] sm:$0xf]
    %v273 = vld [vmem:[#allocation2 + $0x24] sm:$0xf]
    %v274 = vld [vmem:[#allocation2 + $0x28] sm:$0xf]
    %v275 = vld [vmem:[#allocation2 + $0x2c] sm:$0xf]
    %v276 = vld [vmem:[#allocation2 + $0x30] sm:$0xf]
    %v277 = vld [vmem:[#allocation2 + $0x34] sm:$0xf]
    %v278 = vld [vmem:[#allocation2 + $0x38] sm:$0xf]
    %v279 = vld [vmem:[#allocation2 + $0x3c] sm:$0xf]
    %v280 = vld [vmem:[%s4] sm:$0x1]
    %v282 = vlaneseq
    %v283 = vshrl.u32 %v282, 7
    %v284 = vsub.s32 0, %v283
    %v285 = vrot.slane %v280, %v284
    %v303 = vunpack.c.l.b16 %v264
    %v304 = vunpack.c.l.b16 %v265
    %v305 = vunpack.c.l.b16 %v266
    %v306 = vunpack.c.l.b16 %v267
    %v307 = vunpack.c.l.b16 %v268
    %v308 = vunpack.c.l.b16 %v269
    %v309 = vunpack.c.l.b16 %v270
    %v310 = vunpack.c.l.b16 %v271
    %v311 = vunpack.c.l.b16 %v272
    %v312 = vunpack.c.l.b16 %v273
    %v313 = vunpack.c.l.b16 %v274
    %v314 = vunpack.c.l.b16 %v275
    %v315 = vunpack.c.l.b16 %v276
    %v316 = vunpack.c.l.b16 %v277
    %v317 = vunpack.c.l.b16 %v278
    %v318 = vunpack.c.l.b16 %v279
    %v319 = vpack.c.b16 %v304, %v303
    %v320 = vpack.c.b16 %v306, %v305
    %v321 = vpack.c.b16 %v308, %v307
    %v322 = vpack.c.b16 %v310, %v309
    %v323 = vpack.c.b16 %v312, %v311
    %v324 = vpack.c.b16 %v314, %v313
    %v325 = vpack.c.b16 %v316, %v315
    %v326 = vpack.c.b16 %v318, %v317
    %335 = vmatprep.subr.bf16.mxu0 0
    %336 = vmatpush1.bf16.msra.mxu0 %v319
    %337 = vmatprep.subr.bf16.mxu0 0
    %338 = vmatpush1.bf16.msra.mxu0 %v320
    %339 = vmatprep.subr.bf16.mxu0 0
    %340 = vmatpush1.bf16.msra.mxu0 %v321
    %341 = vmatprep.subr.bf16.mxu0 0
    %342 = vmatpush1.bf16.msra.mxu0 %v322
    %343 = vmatprep.subr.bf16.mxu0 0
    %344 = vmatpush1.bf16.msra.mxu0 %v323
    %345 = vmatprep.subr.bf16.mxu0 0
    %346 = vmatpush1.bf16.msra.mxu0 %v324
    %347 = vmatprep.subr.bf16.mxu0 0
    %348 = vmatpush1.bf16.msra.mxu0 %v325
    %349 = vmatprep.subr.bf16.mxu0 0
    %350 = vmatpush1.bf16.msra.mxu0 %v326
    %351 = vmatprep.subr.bf16.mxu0 0
    %352 = vmatpush1.bf16.msra.mxu0 0
    %353 = vmatprep.subr.bf16.mxu0 0
    %354 = vmatpush1.bf16.msra.mxu0 0
    %355 = vmatprep.subr.bf16.mxu0 0
    %356 = vmatpush1.bf16.msra.mxu0 0
    %357 = vmatprep.subr.bf16.mxu0 0
    %358 = vmatpush1.bf16.msra.mxu0 0
    %359 = vmatprep.subr.bf16.mxu0 0
    %360 = vmatpush1.bf16.msra.mxu0 0
    %361 = vmatprep.subr.bf16.mxu0 0
    %362 = vmatpush1.bf16.msra.mxu0 0
    %363 = vmatprep.subr.bf16.mxu0 0
    %364 = vmatpush1.bf16.msra.mxu0 0
    %365 = vmatprep.subr.bf16.mxu0 0
    %366 = vmatpush1.bf16.msra.mxu0 0
    %367 = vmatprep.mubr.bf16.mxu0 0
    %368 = vmatmul.mubr.bf16.gmra.mrb[0].mxu0 %v260
    %v369 = vpop.f32.mrb[0].mxu0
    %v370 = vadd.f32 %v285, %v369
    %v371 = vpop.f32.mrb[0].mxu0
    %v372 = vpop.f32.mrb[0].mxu0
    %v373 = vadd.f32 %v285, %v372
    %v374 = vpop.f32.mrb[0].mxu0
    %375 = vmatprep.mubr.bf16.mxu0 0
    %376 = vmatmul.mubr.bf16.gmra.mrb[0].mxu0 %v261
    %v377 = vpop.f32.mrb[0].mxu0
    %v378 = vadd.f32 %v285, %v377
    %v379 = vpop.f32.mrb[0].mxu0
    %v380 = vpop.f32.mrb[0].mxu0
    %v381 = vadd.f32 %v285, %v380
    %v382 = vpop.f32.mrb[0].mxu0
    %383 = vmatprep.mubr.bf16.mxu0 0
    %384 = vmatmul.mubr.bf16.gmra.mrb[0].mxu0 %v262
    %v385 = vpop.f32.mrb[0].mxu0
    %v386 = vadd.f32 %v285, %v385
    %v387 = vpop.f32.mrb[0].mxu0
    %v388 = vpop.f32.mrb[0].mxu0
    %v389 = vadd.f32 %v285, %v388
    %v390 = vpop.f32.mrb[0].mxu0
    %391 = vmatprep.mubr.bf16.mxu0 0
    %392 = vmatmul.mubr.bf16.gmra.mrb[0].mxu0 %v263
    %v393 = vpop.f32.mrb[0].mxu0
    %v394 = vadd.f32 %v285, %v393
    %v395 = vpop.f32.mrb[0].mxu0
    %v396 = vpop.f32.mrb[0].mxu0
    %v397 = vadd.f32 %v285, %v396
    %v398 = vpop.f32.mrb[0].mxu0
    %399 = vdwg.mxu0
    %v400 = vld [vmem:[#allocation5] sm:$0xff]
    %v401 = vld [vmem:[#allocation5 + $0x8] sm:$0xff]
    %v402 = vld [vmem:[#allocation5 + $0x10] sm:$0xff]
    %v403 = vld [vmem:[#allocation5 + $0x18] sm:$0xff]
    %v404 = vld [vmem:[#allocation5 + $0x20] sm:$0xff]
    %v405 = vld [vmem:[#allocation5 + $0x28] sm:$0xff]
    %v406 = vld [vmem:[#allocation5 + $0x30] sm:$0xff]
    %v407 = vld [vmem:[#allocation5 + $0x38] sm:$0xff]
    %v408 = vld [vmem:[#allocation5 + $0x40] sm:$0xff]
    %v409 = vld [vmem:[#allocation5 + $0x48] sm:$0xff]
    %v410 = vld [vmem:[#allocation5 + $0x50] sm:$0xff]
    %v411 = vld [vmem:[#allocation5 + $0x58] sm:$0xff]
    %v412 = vld [vmem:[#allocation5 + $0x60] sm:$0xff]
    %v413 = vld [vmem:[#allocation5 + $0x68] sm:$0xff]
    %v414 = vld [vmem:[#allocation5 + $0x70] sm:$0xff]
    %v415 = vld [vmem:[#allocation5 + $0x78] sm:$0xff]
    %416 = vmatprep.subr.mxu0 0.0
    %417 = vmatpush1.msra.mxu0 %v400
    %418 = vmatprep.subr.mxu0 0.0
    %419 = vmatpush1.msra.mxu0 %v401
    %420 = vmatprep.subr.mxu0 0.0
    %421 = vmatpush1.msra.mxu0 %v402
    %422 = vmatprep.subr.mxu0 0.0
    %423 = vmatpush1.msra.mxu0 %v403
    %424 = vmatprep.subr.mxu0 0.0
    %425 = vmatpush1.msra.mxu0 %v404
    %426 = vmatprep.subr.mxu0 0.0
    %427 = vmatpush1.msra.mxu0 %v405
    %428 = vmatprep.subr.mxu0 0.0
    %429 = vmatpush1.msra.mxu0 %v406
    %430 = vmatprep.subr.mxu0 0.0
    %431 = vmatpush1.msra.mxu0 %v407
    %432 = vmatprep.subr.mxu0 0.0
    %433 = vmatpush1.msra.mxu0 %v408
    %434 = vmatprep.subr.mxu0 0.0
    %435 = vmatpush1.msra.mxu0 %v409
    %436 = vmatprep.subr.mxu0 0.0
    %437 = vmatpush1.msra.mxu0 %v410
    %438 = vmatprep.subr.mxu0 0.0
    %439 = vmatpush1.msra.mxu0 %v411
    %440 = vmatprep.subr.mxu0 0.0
    %441 = vmatpush1.msra.mxu0 %v412
    %442 = vmatprep.subr.mxu0 0.0
    %443 = vmatpush1.msra.mxu0 %v413
    %444 = vmatprep.subr.mxu0 0.0
    %445 = vmatpush1.msra.mxu0 %v414
    %446 = vmatprep.subr.mxu0 0.0
    %447 = vmatpush1.msra.mxu0 %v415
    %448 = vmatprep.subr.mxu0 0.0
    %449 = vmatpush1.msra.mxu0 0.0
    %450 = vmatprep.subr.mxu0 0.0
    %451 = vmatpush1.msra.mxu0 0.0
    %452 = vmatprep.subr.mxu0 0.0
    %453 = vmatpush1.msra.mxu0 0.0
    %454 = vmatprep.subr.mxu0 0.0
    %455 = vmatpush1.msra.mxu0 0.0
    %456 = vmatprep.subr.mxu0 0.0
    %457 = vmatpush1.msra.mxu0 0.0
    %458 = vmatprep.subr.mxu0 0.0
    %459 = vmatpush1.msra.mxu0 0.0
    %460 = vmatprep.subr.mxu0 0.0
    %461 = vmatpush1.msra.mxu0 0.0
    %462 = vmatprep.subr.mxu0 0.0
    %463 = vmatpush1.msra.mxu0 0.0
    %464 = vmatprep.subr.mxu0 0.0
    %465 = vmatpush1.msra.mxu0 0.0
    %466 = vmatprep.subr.mxu0 0.0
    %467 = vmatpush1.msra.mxu0 0.0
    %468 = vmatprep.subr.mxu0 0.0
    %469 = vmatpush1.msra.mxu0 0.0
    %470 = vmatprep.subr.mxu0 0.0
    %471 = vmatpush1.msra.mxu0 0.0
    %472 = vmatprep.subr.mxu0 0.0
    %473 = vmatpush1.msra.mxu0 0.0
    %474 = vmatprep.subr.mxu0 0.0
    %475 = vmatpush1.msra.mxu0 0.0
    %476 = vmatprep.subr.mxu0 0.0
    %477 = vmatpush1.msra.mxu0 0.0
    %478 = vmatprep.subr.mxu0 0.0
    %479 = vmatpush1.msra.mxu0 0.0
    %480 = vmatprep.mubr.f32.mxu0 0.0
    %481 = vmatmul.mubr.f32.gmra.mrb[0].mxu0 0.0
    %v482 = vpop.f32.mrb[0].mxu0
    %v483 = vadd.f32 0.0, %v482
    %v484 = vpop.f32.mrb[0].mxu0
    %485 = vdwg.mxu0
    %v486 = vadd.f32 %v370, %v483
    %v487 = vtanh.pop %v486
    %488 = vmatprep.subr.mxu0 0.0
    %489 = vmatpush1.msra.mxu0 %v400
    %490 = vmatprep.subr.mxu0 0.0
    %491 = vmatpush1.msra.mxu0 %v401
    %492 = vmatprep.subr.mxu0 0.0
    %493 = vmatpush1.msra.mxu0 %v402
    %494 = vmatprep.subr.mxu0 0.0
    %495 = vmatpush1.msra.mxu0 %v403
    %496 = vmatprep.subr.mxu0 0.0
    %497 = vmatpush1.msra.mxu0 %v404
    %498 = vmatprep.subr.mxu0 0.0
    %499 = vmatpush1.msra.mxu0 %v405
    %500 = vmatprep.subr.mxu0 0.0
    %501 = vmatpush1.msra.mxu0 %v406
    %502 = vmatprep.subr.mxu0 0.0
    %503 = vmatpush1.msra.mxu0 %v407
    %504 = vmatprep.subr.mxu0 0.0
    %505 = vmatpush1.msra.mxu0 %v408
    %506 = vmatprep.subr.mxu0 0.0
    %507 = vmatpush1.msra.mxu0 %v409
    %508 = vmatprep.subr.mxu0 0.0
    %509 = vmatpush1.msra.mxu0 %v410
    %510 = vmatprep.subr.mxu0 0.0
    %511 = vmatpush1.msra.mxu0 %v411
    %512 = vmatprep.subr.mxu0 0.0
    %513 = vmatpush1.msra.mxu0 %v412
    %514 = vmatprep.subr.mxu0 0.0
    %515 = vmatpush1.msra.mxu0 %v413
    %516 = vmatprep.subr.mxu0 0.0
    %517 = vmatpush1.msra.mxu0 %v414
    %518 = vmatprep.subr.mxu0 0.0
    %519 = vmatpush1.msra.mxu0 %v415
    %520 = vmatprep.subr.mxu0 0.0
    %521 = vmatpush1.msra.mxu0 0.0
    %522 = vmatprep.subr.mxu0 0.0
    %523 = vmatpush1.msra.mxu0 0.0
    %524 = vmatprep.subr.mxu0 0.0
    %525 = vmatpush1.msra.mxu0 0.0
    %526 = vmatprep.subr.mxu0 0.0
    %527 = vmatpush1.msra.mxu0 0.0
    %528 = vmatprep.subr.mxu0 0.0
    %529 = vmatpush1.msra.mxu0 0.0
    %530 = vmatprep.subr.mxu0 0.0
    %531 = vmatpush1.msra.mxu0 0.0
    %532 = vmatprep.subr.mxu0 0.0
    %533 = vmatpush1.msra.mxu0 0.0
    %534 = vmatprep.subr.mxu0 0.0
    %535 = vmatpush1.msra.mxu0 0.0
    %536 = vmatprep.subr.mxu0 0.0
    %537 = vmatpush1.msra.mxu0 0.0
    %538 = vmatprep.subr.mxu0 0.0
    %539 = vmatpush1.msra.mxu0 0.0
    %540 = vmatprep.subr.mxu0 0.0
    %541 = vmatpush1.msra.mxu0 0.0
    %542 = vmatprep.subr.mxu0 0.0
    %543 = vmatpush1.msra.mxu0 0.0
    %544 = vmatprep.subr.mxu0 0.0
    %545 = vmatpush1.msra.mxu0 0.0
    %546 = vmatprep.subr.mxu0 0.0
    %547 = vmatpush1.msra.mxu0 0.0
    %548 = vmatprep.subr.mxu0 0.0
    %549 = vmatpush1.msra.mxu0 0.0
    %550 = vmatprep.subr.mxu0 0.0
    %551 = vmatpush1.msra.mxu0 0.0
    %552 = vmatprep.mubr.f32.mxu0 0.0
    %553 = vmatmul.mubr.f32.gmra.mrb[0].mxu0 %v487
    %v554 = vpop.f32.mrb[0].mxu0
    %v555 = vadd.f32 0.0, %v554
    %v556 = vpop.f32.mrb[0].mxu0
    %557 = vdwg.mxu0
    %v558 = vadd.f32 %v373, %v555
    %v559 = vtanh.pop %v558
    %560 = vmatprep.subr.mxu0 0.0
    %561 = vmatpush1.msra.mxu0 %v400
    %562 = vmatprep.subr.mxu0 0.0
    %563 = vmatpush1.msra.mxu0 %v401
    %564 = vmatprep.subr.mxu0 0.0
    %565 = vmatpush1.msra.mxu0 %v402
    %566 = vmatprep.subr.mxu0 0.0
    %567 = vmatpush1.msra.mxu0 %v403
    %568 = vmatprep.subr.mxu0 0.0
    %569 = vmatpush1.msra.mxu0 %v404
    %570 = vmatprep.subr.mxu0 0.0
    %571 = vmatpush1.msra.mxu0 %v405
    %572 = vmatprep.subr.mxu0 0.0
    %573 = vmatpush1.msra.mxu0 %v406
    %574 = vmatprep.subr.mxu0 0.0
    %575 = vmatpush1.msra.mxu0 %v407
    %576 = vmatprep.subr.mxu0 0.0
    %577 = vmatpush1.msra.mxu0 %v408
    %578 = vmatprep.subr.mxu0 0.0
    %579 = vmatpush1.msra.mxu0 %v409
    %580 = vmatprep.subr.mxu0 0.0
    %581 = vmatpush1.msra.mxu0 %v410
    %582 = vmatprep.subr.mxu0 0.0
    %583 = vmatpush1.msra.mxu0 %v411
    %584 = vmatprep.subr.mxu0 0.0
    %585 = vmatpush1.msra.mxu0 %v412
    %586 = vmatprep.subr.mxu0 0.0
    %587 = vmatpush1.msra.mxu0 %v413
    %588 = vmatprep.subr.mxu0 0.0
    %589 = vmatpush1.msra.mxu0 %v414
    %590 = vmatprep.subr.mxu0 0.0
    %591 = vmatpush1.msra.mxu0 %v415
    %592 = vmatprep.subr.mxu0 0.0
    %593 = vmatpush1.msra.mxu0 0.0
    %594 = vmatprep.subr.mxu0 0.0
    %595 = vmatpush1.msra.mxu0 0.0
    %596 = vmatprep.subr.mxu0 0.0
    %597 = vmatpush1.msra.mxu0 0.0
    %598 = vmatprep.subr.mxu0 0.0
    %599 = vmatpush1.msra.mxu0 0.0
    %600 = vmatprep.subr.mxu0 0.0
    %601 = vmatpush1.msra.mxu0 0.0
    %602 = vmatprep.subr.mxu0 0.0
    %603 = vmatpush1.msra.mxu0 0.0
    %604 = vmatprep.subr.mxu0 0.0
    %605 = vmatpush1.msra.mxu0 0.0
    %606 = vmatprep.subr.mxu0 0.0
    %607 = vmatpush1.msra.mxu0 0.0
    %608 = vmatprep.subr.mxu0 0.0
    %609 = vmatpush1.msra.mxu0 0.0
    %610 = vmatprep.subr.mxu0 0.0
    %611 = vmatpush1.msra.mxu0 0.0
    %612 = vmatprep.subr.mxu0 0.0
    %613 = vmatpush1.msra.mxu0 0.0
    %614 = vmatprep.subr.mxu0 0.0
    %615 = vmatpush1.msra.mxu0 0.0
    %616 = vmatprep.subr.mxu0 0.0
    %617 = vmatpush1.msra.mxu0 0.0
    %618 = vmatprep.subr.mxu0 0.0
    %619 = vmatpush1.msra.mxu0 0.0
    %620 = vmatprep.subr.mxu0 0.0
    %621 = vmatpush1.msra.mxu0 0.0
    %622 = vmatprep.subr.mxu0 0.0
    %623 = vmatpush1.msra.mxu0 0.0
    %624 = vmatprep.mubr.f32.mxu0 0.0
    %625 = vmatmul.mubr.f32.gmra.mrb[0].mxu0 %v559
    %v626 = vpop.f32.mrb[0].mxu0
    %v627 = vadd.f32 0.0, %v626
    %v628 = vpop.f32.mrb[0].mxu0
    %629 = vdwg.mxu0
    %v630 = vadd.f32 %v378, %v627
    %v631 = vtanh.pop %v630
    %632 = vmatprep.subr.mxu0 0.0
    %633 = vmatpush1.msra.mxu0 %v400
    %634 = vmatprep.subr.mxu0 0.0
    %635 = vmatpush1.msra.mxu0 %v401
    %636 = vmatprep.subr.mxu0 0.0
    %637 = vmatpush1.msra.mxu0 %v402
    %638 = vmatprep.subr.mxu0 0.0
    %639 = vmatpush1.msra.mxu0 %v403
    %640 = vmatprep.subr.mxu0 0.0
    %641 = vmatpush1.msra.mxu0 %v404
    %642 = vmatprep.subr.mxu0 0.0
    %643 = vmatpush1.msra.mxu0 %v405
    %644 = vmatprep.subr.mxu0 0.0
    %645 = vmatpush1.msra.mxu0 %v406
    %646 = vmatprep.subr.mxu0 0.0
    %647 = vmatpush1.msra.mxu0 %v407
    %648 = vmatprep.subr.mxu0 0.0
    %649 = vmatpush1.msra.mxu0 %v408
    %650 = vmatprep.subr.mxu0 0.0
    %651 = vmatpush1.msra.mxu0 %v409
    %652 = vmatprep.subr.mxu0 0.0
    %653 = vmatpush1.msra.mxu0 %v410
    %654 = vmatprep.subr.mxu0 0.0
    %655 = vmatpush1.msra.mxu0 %v411
    %656 = vmatprep.subr.mxu0 0.0
    %657 = vmatpush1.msra.mxu0 %v412
    %658 = vmatprep.subr.mxu0 0.0
    %659 = vmatpush1.msra.mxu0 %v413
    %660 = vmatprep.subr.mxu0 0.0
    %661 = vmatpush1.msra.mxu0 %v414
    %662 = vmatprep.subr.mxu0 0.0
    %663 = vmatpush1.msra.mxu0 %v415
    %664 = vmatprep.subr.mxu0 0.0
    %665 = vmatpush1.msra.mxu0 0.0
    %666 = vmatprep.subr.mxu0 0.0
    %667 = vmatpush1.msra.mxu0 0.0
    %668 = vmatprep.subr.mxu0 0.0
    %669 = vmatpush1.msra.mxu0 0.0
    %670 = vmatprep.subr.mxu0 0.0
    %671 = vmatpush1.msra.mxu0 0.0
    %672 = vmatprep.subr.mxu0 0.0
    %673 = vmatpush1.msra.mxu0 0.0
    %674 = vmatprep.subr.mxu0 0.0
    %675 = vmatpush1.msra.mxu0 0.0
    %676 = vmatprep.subr.mxu0 0.0
    %677 = vmatpush1.msra.mxu0 0.0
    %678 = vmatprep.subr.mxu0 0.0
    %679 = vmatpush1.msra.mxu0 0.0
    %680 = vmatprep.subr.mxu0 0.0
    %681 = vmatpush1.msra.mxu0 0.0
    %682 = vmatprep.subr.mxu0 0.0
    %683 = vmatpush1.msra.mxu0 0.0
    %684 = vmatprep.subr.mxu0 0.0
    %685 = vmatpush1.msra.mxu0 0.0
    %686 = vmatprep.subr.mxu0 0.0
    %687 = vmatpush1.msra.mxu0 0.0
    %688 = vmatprep.subr.mxu0 0.0
    %689 = vmatpush1.msra.mxu0 0.0
    %690 = vmatprep.subr.mxu0 0.0
    %691 = vmatpush1.msra.mxu0 0.0
    %692 = vmatprep.subr.mxu0 0.0
    %693 = vmatpush1.msra.mxu0 0.0
    %694 = vmatprep.subr.mxu0 0.0
    %695 = vmatpush1.msra.mxu0 0.0
    %696 = vmatprep.mubr.f32.mxu0 0.0
    %697 = vmatmul.mubr.f32.gmra.mrb[0].mxu0 %v631
    %v698 = vpop.f32.mrb[0].mxu0
    %v699 = vadd.f32 0.0, %v698
    %v700 = vpop.f32.mrb[0].mxu0
    %701 = vdwg.mxu0
    %v702 = vadd.f32 %v381, %v699
    %v703 = vtanh.pop %v702
    %704 = vmatprep.subr.mxu0 0.0
    %705 = vmatpush1.msra.mxu0 %v400
    %706 = vmatprep.subr.mxu0 0.0
    %707 = vmatpush1.msra.mxu0 %v401
    %708 = vmatprep.subr.mxu0 0.0
    %709 = vmatpush1.msra.mxu0 %v402
    %710 = vmatprep.subr.mxu0 0.0
    %711 = vmatpush1.msra.mxu0 %v403
    %712 = vmatprep.subr.mxu0 0.0
    %713 = vmatpush1.msra.mxu0 %v404
    %714 = vmatprep.subr.mxu0 0.0
    %715 = vmatpush1.msra.mxu0 %v405
    %716 = vmatprep.subr.mxu0 0.0
    %717 = vmatpush1.msra.mxu0 %v406
    %718 = vmatprep.subr.mxu0 0.0
    %719 = vmatpush1.msra.mxu0 %v407
    %720 = vmatprep.subr.mxu0 0.0
    %721 = vmatpush1.msra.mxu0 %v408
    %722 = vmatprep.subr.mxu0 0.0
    %723 = vmatpush1.msra.mxu0 %v409
    %724 = vmatprep.subr.mxu0 0.0
    %725 = vmatpush1.msra.mxu0 %v410
    %726 = vmatprep.subr.mxu0 0.0
    %727 = vmatpush1.msra.mxu0 %v411
    %728 = vmatprep.subr.mxu0 0.0
    %729 = vmatpush1.msra.mxu0 %v412
    %730 = vmatprep.subr.mxu0 0.0
    %731 = vmatpush1.msra.mxu0 %v413
    %732 = vmatprep.subr.mxu0 0.0
    %733 = vmatpush1.msra.mxu0 %v414
    %734 = vmatprep.subr.mxu0 0.0
    %735 = vmatpush1.msra.mxu0 %v415
    %736 = vmatprep.subr.mxu0 0.0
    %737 = vmatpush1.msra.mxu0 0.0
    %738 = vmatprep.subr.mxu0 0.0
    %739 = vmatpush1.msra.mxu0 0.0
    %740 = vmatprep.subr.mxu0 0.0
    %741 = vmatpush1.msra.mxu0 0.0
    %742 = vmatprep.subr.mxu0 0.0
    %743 = vmatpush1.msra.mxu0 0.0
    %744 = vmatprep.subr.mxu0 0.0
    %745 = vmatpush1.msra.mxu0 0.0
    %746 = vmatprep.subr.mxu0 0.0
    %747 = vmatpush1.msra.mxu0 0.0
    %748 = vmatprep.subr.mxu0 0.0
    %749 = vmatpush1.msra.mxu0 0.0
    %750 = vmatprep.subr.mxu0 0.0
    %751 = vmatpush1.msra.mxu0 0.0
    %752 = vmatprep.subr.mxu0 0.0
    %753 = vmatpush1.msra.mxu0 0.0
    %754 = vmatprep.subr.mxu0 0.0
    %755 = vmatpush1.msra.mxu0 0.0
    %756 = vmatprep.subr.mxu0 0.0
    %757 = vmatpush1.msra.mxu0 0.0
    %758 = vmatprep.subr.mxu0 0.0
    %759 = vmatpush1.msra.mxu0 0.0
    %760 = vmatprep.subr.mxu0 0.0
    %761 = vmatpush1.msra.mxu0 0.0
    %762 = vmatprep.subr.mxu0 0.0
    %763 = vmatpush1.msra.mxu0 0.0
    %764 = vmatprep.subr.mxu0 0.0
    %765 = vmatpush1.msra.mxu0 0.0
    %766 = vmatprep.subr.mxu0 0.0
    %767 = vmatpush1.msra.mxu0 0.0
    %768 = vmatprep.mubr.f32.mxu0 0.0
    %769 = vmatmul.mubr.f32.gmra.mrb[0].mxu0 %v703
    %v770 = vpop.f32.mrb[0].mxu0
    %v771 = vadd.f32 0.0, %v770
    %v772 = vpop.f32.mrb[0].mxu0
    %773 = vdwg.mxu0
    %v774 = vadd.f32 %v386, %v771
    %v775 = vtanh.pop %v774
    %776 = vmatprep.subr.mxu0 0.0
    %777 = vmatpush1.msra.mxu0 %v400
    %778 = vmatprep.subr.mxu0 0.0
    %779 = vmatpush1.msra.mxu0 %v401
    %780 = vmatprep.subr.mxu0 0.0
    %781 = vmatpush1.msra.mxu0 %v402
    %782 = vmatprep.subr.mxu0 0.0
    %783 = vmatpush1.msra.mxu0 %v403
    %784 = vmatprep.subr.mxu0 0.0
    %785 = vmatpush1.msra.mxu0 %v404
    %786 = vmatprep.subr.mxu0 0.0
    %787 = vmatpush1.msra.mxu0 %v405
    %788 = vmatprep.subr.mxu0 0.0
    %789 = vmatpush1.msra.mxu0 %v406
    %790 = vmatprep.subr.mxu0 0.0
    %791 = vmatpush1.msra.mxu0 %v407
    %792 = vmatprep.subr.mxu0 0.0
    %793 = vmatpush1.msra.mxu0 %v408
    %794 = vmatprep.subr.mxu0 0.0
    %795 = vmatpush1.msra.mxu0 %v409
    %796 = vmatprep.subr.mxu0 0.0
    %797 = vmatpush1.msra.mxu0 %v410
    %798 = vmatprep.subr.mxu0 0.0
    %799 = vmatpush1.msra.mxu0 %v411
    %800 = vmatprep.subr.mxu0 0.0
    %801 = vmatpush1.msra.mxu0 %v412
    %802 = vmatprep.subr.mxu0 0.0
    %803 = vmatpush1.msra.mxu0 %v413
    %804 = vmatprep.subr.mxu0 0.0
    %805 = vmatpush1.msra.mxu0 %v414
    %806 = vmatprep.subr.mxu0 0.0
    %807 = vmatpush1.msra.mxu0 %v415
    %808 = vmatprep.subr.mxu0 0.0
    %809 = vmatpush1.msra.mxu0 0.0
    %810 = vmatprep.subr.mxu0 0.0
    %811 = vmatpush1.msra.mxu0 0.0
    %812 = vmatprep.subr.mxu0 0.0
    %813 = vmatpush1.msra.mxu0 0.0
    %814 = vmatprep.subr.mxu0 0.0
    %815 = vmatpush1.msra.mxu0 0.0
    %816 = vmatprep.subr.mxu0 0.0
    %817 = vmatpush1.msra.mxu0 0.0
    %818 = vmatprep.subr.mxu0 0.0
    %819 = vmatpush1.msra.mxu0 0.0
    %820 = vmatprep.subr.mxu0 0.0
    %821 = vmatpush1.msra.mxu0 0.0
    %822 = vmatprep.subr.mxu0 0.0
    %823 = vmatpush1.msra.mxu0 0.0
    %824 = vmatprep.subr.mxu0 0.0
    %825 = vmatpush1.msra.mxu0 0.0
    %826 = vmatprep.subr.mxu0 0.0
    %827 = vmatpush1.msra.mxu0 0.0
    %828 = vmatprep.subr.mxu0 0.0
    %829 = vmatpush1.msra.mxu0 0.0
    %830 = vmatprep.subr.mxu0 0.0
    %831 = vmatpush1.msra.mxu0 0.0
    %832 = vmatprep.subr.mxu0 0.0
    %833 = vmatpush1.msra.mxu0 0.0
    %834 = vmatprep.subr.mxu0 0.0
    %835 = vmatpush1.msra.mxu0 0.0
    %836 = vmatprep.subr.mxu0 0.0
    %837 = vmatpush1.msra.mxu0 0.0
    %838 = vmatprep.subr.mxu0 0.0
    %839 = vmatpush1.msra.mxu0 0.0
    %840 = vmatprep.mubr.f32.mxu0 0.0
    %841 = vmatmul.mubr.f32.gmra.mrb[0].mxu0 %v775
    %v842 = vpop.f32.mrb[0].mxu0
    %v843 = vadd.f32 0.0, %v842
    %v844 = vpop.f32.mrb[0].mxu0
    %845 = vdwg.mxu0
    %v846 = vadd.f32 %v389, %v843
    %v847 = vtanh.pop %v846
    %848 = vmatprep.subr.mxu0 0.0
    %849 = vmatpush1.msra.mxu0 %v400
    %850 = vmatprep.subr.mxu0 0.0
    %851 = vmatpush1.msra.mxu0 %v401
    %852 = vmatprep.subr.mxu0 0.0
    %853 = vmatpush1.msra.mxu0 %v402
    %854 = vmatprep.subr.mxu0 0.0
    %855 = vmatpush1.msra.mxu0 %v403
    %856 = vmatprep.subr.mxu0 0.0
    %857 = vmatpush1.msra.mxu0 %v404
    %858 = vmatprep.subr.mxu0 0.0
    %859 = vmatpush1.msra.mxu0 %v405
    %860 = vmatprep.subr.mxu0 0.0
    %861 = vmatpush1.msra.mxu0 %v406
    %862 = vmatprep.subr.mxu0 0.0
    %863 = vmatpush1.msra.mxu0 %v407
    %864 = vmatprep.subr.mxu0 0.0
    %865 = vmatpush1.msra.mxu0 %v408
    %866 = vmatprep.subr.mxu0 0.0
    %867 = vmatpush1.msra.mxu0 %v409
    %868 = vmatprep.subr.mxu0 0.0
    %869 = vmatpush1.msra.mxu0 %v410
    %870 = vmatprep.subr.mxu0 0.0
    %871 = vmatpush1.msra.mxu0 %v411
    %872 = vmatprep.subr.mxu0 0.0
    %873 = vmatpush1.msra.mxu0 %v412
    %874 = vmatprep.subr.mxu0 0.0
    %875 = vmatpush1.msra.mxu0 %v413
    %876 = vmatprep.subr.mxu0 0.0
    %877 = vmatpush1.msra.mxu0 %v414
    %878 = vmatprep.subr.mxu0 0.0
    %879 = vmatpush1.msra.mxu0 %v415
    %880 = vmatprep.subr.mxu0 0.0
    %881 = vmatpush1.msra.mxu0 0.0
    %882 = vmatprep.subr.mxu0 0.0
    %883 = vmatpush1.msra.mxu0 0.0
    %884 = vmatprep.subr.mxu0 0.0
    %885 = vmatpush1.msra.mxu0 0.0
    %886 = vmatprep.subr.mxu0 0.0
    %887 = vmatpush1.msra.mxu0 0.0
    %888 = vmatprep.subr.mxu0 0.0
    %889 = vmatpush1.msra.mxu0 0.0
    %890 = vmatprep.subr.mxu0 0.0
    %891 = vmatpush1.msra.mxu0 0.0
    %892 = vmatprep.subr.mxu0 0.0
    %893 = vmatpush1.msra.mxu0 0.0
    %894 = vmatprep.subr.mxu0 0.0
    %895 = vmatpush1.msra.mxu0 0.0
    %896 = vmatprep.subr.mxu0 0.0
    %897 = vmatpush1.msra.mxu0 0.0
    %898 = vmatprep.subr.mxu0 0.0
    %899 = vmatpush1.msra.mxu0 0.0
    %900 = vmatprep.subr.mxu0 0.0
    %901 = vmatpush1.msra.mxu0 0.0
    %902 = vmatprep.subr.mxu0 0.0
    %903 = vmatpush1.msra.mxu0 0.0
    %904 = vmatprep.subr.mxu0 0.0
    %905 = vmatpush1.msra.mxu0 0.0
    %906 = vmatprep.subr.mxu0 0.0
    %907 = vmatpush1.msra.mxu0 0.0
    %908 = vmatprep.subr.mxu0 0.0
    %909 = vmatpush1.msra.mxu0 0.0
    %910 = vmatprep.subr.mxu0 0.0
    %911 = vmatpush1.msra.mxu0 0.0
    %912 = vmatprep.mubr.f32.mxu0 0.0
    %913 = vmatmul.mubr.f32.gmra.mrb[0].mxu0 %v847
    %v914 = vpop.f32.mrb[0].mxu0
    %v915 = vadd.f32 0.0, %v914
    %v916 = vpop.f32.mrb[0].mxu0
    %917 = vdwg.mxu0
    %v918 = vadd.f32 %v394, %v915
    %v919 = vtanh.pop %v918
    %920 = vmatprep.subr.mxu0 0.0
    %921 = vmatpush1.msra.mxu0 %v400
    %922 = vmatprep.subr.mxu0 0.0
    %923 = vmatpush1.msra.mxu0 %v401
    %924 = vmatprep.subr.mxu0 0.0
    %925 = vmatpush1.msra.mxu0 %v402
    %926 = vmatprep.subr.mxu0 0.0
    %927 = vmatpush1.msra.mxu0 %v403
    %928 = vmatprep.subr.mxu0 0.0
    %929 = vmatpush1.msra.mxu0 %v404
    %930 = vmatprep.subr.mxu0 0.0
    %931 = vmatpush1.msra.mxu0 %v405
    %932 = vmatprep.subr.mxu0 0.0
    %933 = vmatpush1.msra.mxu0 %v406
    %934 = vmatprep.subr.mxu0 0.0
    %935 = vmatpush1.msra.mxu0 %v407
    %936 = vmatprep.subr.mxu0 0.0
    %937 = vmatpush1.msra.mxu0 %v408
    %938 = vmatprep.subr.mxu0 0.0
    %939 = vmatpush1.msra.mxu0 %v409
    %940 = vmatprep.subr.mxu0 0.0
    %941 = vmatpush1.msra.mxu0 %v410
    %942 = vmatprep.subr.mxu0 0.0
    %943 = vmatpush1.msra.mxu0 %v411
    %944 = vmatprep.subr.mxu0 0.0
    %945 = vmatpush1.msra.mxu0 %v412
    %946 = vmatprep.subr.mxu0 0.0
    %947 = vmatpush1.msra.mxu0 %v413
    %948 = vmatprep.subr.mxu0 0.0
    %949 = vmatpush1.msra.mxu0 %v414
    %950 = vmatprep.subr.mxu0 0.0
    %951 = vmatpush1.msra.mxu0 %v415
    %952 = vmatprep.subr.mxu0 0.0
    %953 = vmatpush1.msra.mxu0 0.0
    %954 = vmatprep.subr.mxu0 0.0
    %955 = vmatpush1.msra.mxu0 0.0
    %956 = vmatprep.subr.mxu0 0.0
    %957 = vmatpush1.msra.mxu0 0.0
    %958 = vmatprep.subr.mxu0 0.0
    %959 = vmatpush1.msra.mxu0 0.0
    %960 = vmatprep.subr.mxu0 0.0
    %961 = vmatpush1.msra.mxu0 0.0
    %962 = vmatprep.subr.mxu0 0.0
    %963 = vmatpush1.msra.mxu0 0.0
    %964 = vmatprep.subr.mxu0 0.0
    %965 = vmatpush1.msra.mxu0 0.0
    %966 = vmatprep.subr.mxu0 0.0
    %967 = vmatpush1.msra.mxu0 0.0
    %968 = vmatprep.subr.mxu0 0.0
    %969 = vmatpush1.msra.mxu0 0.0
    %970 = vmatprep.subr.mxu0 0.0
    %971 = vmatpush1.msra.mxu0 0.0
    %972 = vmatprep.subr.mxu0 0.0
    %973 = vmatpush1.msra.mxu0 0.0
    %974 = vmatprep.subr.mxu0 0.0
    %975 = vmatpush1.msra.mxu0 0.0
    %976 = vmatprep.subr.mxu0 0.0
    %977 = vmatpush1.msra.mxu0 0.0
    %978 = vmatprep.subr.mxu0 0.0
    %979 = vmatpush1.msra.mxu0 0.0
    %980 = vmatprep.subr.mxu0 0.0
    %981 = vmatpush1.msra.mxu0 0.0
    %982 = vmatprep.subr.mxu0 0.0
    %983 = vmatpush1.msra.mxu0 0.0
    %984 = vmatprep.mubr.f32.mxu0 0.0
    %985 = vmatmul.mubr.f32.gmra.mrb[0].mxu0 %v919
    %v986 = vpop.f32.mrb[0].mxu0
    %v987 = vadd.f32 0.0, %v986
    %v988 = vpop.f32.mrb[0].mxu0
    %989 = vdwg.mxu0
    %v990 = vadd.f32 %v397, %v987
    %v991 = vtanh.pop %v990
    %v992 = vld [vmem:[#allocation7] sm:$0xff]
    %v993 = vld [vmem:[#allocation7 + $0x8] sm:$0xff]
    %v994 = vld [vmem:[#allocation7 + $0x10] sm:$0xff]
    %v995 = vld [vmem:[#allocation7 + $0x18] sm:$0xff]
    %v996 = vld [vmem:[#allocation7 + $0x20] sm:$0xff]
    %v997 = vld [vmem:[#allocation7 + $0x28] sm:$0xff]
    %v998 = vld [vmem:[#allocation7 + $0x30] sm:$0xff]
    %v999 = vld [vmem:[#allocation7 + $0x38] sm:$0xff]
    %v1000 = vld [vmem:[#allocation7 + $0x40] sm:$0xff]
    %v1001 = vld [vmem:[#allocation7 + $0x48] sm:$0xff]
    %v1002 = vld [vmem:[#allocation7 + $0x50] sm:$0xff]
    %v1003 = vld [vmem:[#allocation7 + $0x58] sm:$0xff]
    %v1004 = vld [vmem:[#allocation7 + $0x60] sm:$0xff]
    %v1005 = vld [vmem:[#allocation7 + $0x68] sm:$0xff]
    %v1006 = vld [vmem:[#allocation7 + $0x70] sm:$0xff]
    %v1007 = vld [vmem:[#allocation7 + $0x78] sm:$0xff]
    %v1008 = vld [vmem:[%s6] sm:$0x1]
    %v1010 = vlaneseq
    %v1011 = vshrl.u32 %v1010, 7
    %v1012 = vsub.s32 0, %v1011
    %v1013 = vrot.slane %v1008, %v1012
    %1015 = vmatprep.subr.mxu0 0.0
    %1016 = vmatpush1.msra.mxu0 %v992
    %1017 = vmatprep.subr.mxu0 0.0
    %1018 = vmatpush1.msra.mxu0 %v993
    %1019 = vmatprep.subr.mxu0 0.0
    %1020 = vmatpush1.msra.mxu0 %v994
    %1021 = vmatprep.subr.mxu0 0.0
    %1022 = vmatpush1.msra.mxu0 %v995
    %1023 = vmatprep.subr.mxu0 0.0
    %1024 = vmatpush1.msra.mxu0 %v996
    %1025 = vmatprep.subr.mxu0 0.0
    %1026 = vmatpush1.msra.mxu0 %v997
    %1027 = vmatprep.subr.mxu0 0.0
    %1028 = vmatpush1.msra.mxu0 %v998
    %1029 = vmatprep.subr.mxu0 0.0
    %1030 = vmatpush1.msra.mxu0 %v999
    %1031 = vmatprep.subr.mxu0 0.0
    %1032 = vmatpush1.msra.mxu0 %v1000
    %1033 = vmatprep.subr.mxu0 0.0
    %1034 = vmatpush1.msra.mxu0 %v1001
    %1035 = vmatprep.subr.mxu0 0.0
    %1036 = vmatpush1.msra.mxu0 %v1002
    %1037 = vmatprep.subr.mxu0 0.0
    %1038 = vmatpush1.msra.mxu0 %v1003
    %1039 = vmatprep.subr.mxu0 0.0
    %1040 = vmatpush1.msra.mxu0 %v1004
    %1041 = vmatprep.subr.mxu0 0.0
    %1042 = vmatpush1.msra.mxu0 %v1005
    %1043 = vmatprep.subr.mxu0 0.0
    %1044 = vmatpush1.msra.mxu0 %v1006
    %1045 = vmatprep.subr.mxu0 0.0
    %1046 = vmatpush1.msra.mxu0 %v1007
    %1047 = vmatprep.subr.mxu0 0.0
    %1048 = vmatpush1.msra.mxu0 0.0
    %1049 = vmatprep.subr.mxu0 0.0
    %1050 = vmatpush1.msra.mxu0 0.0
    %1051 = vmatprep.subr.mxu0 0.0
    %1052 = vmatpush1.msra.mxu0 0.0
    %1053 = vmatprep.subr.mxu0 0.0
    %1054 = vmatpush1.msra.mxu0 0.0
    %1055 = vmatprep.subr.mxu0 0.0
    %1056 = vmatpush1.msra.mxu0 0.0
    %1057 = vmatprep.subr.mxu0 0.0
    %1058 = vmatpush1.msra.mxu0 0.0
    %1059 = vmatprep.subr.mxu0 0.0
    %1060 = vmatpush1.msra.mxu0 0.0
    %1061 = vmatprep.subr.mxu0 0.0
    %1062 = vmatpush1.msra.mxu0 0.0
    %1063 = vmatprep.subr.mxu0 0.0
    %1064 = vmatpush1.msra.mxu0 0.0
    %1065 = vmatprep.subr.mxu0 0.0
    %1066 = vmatpush1.msra.mxu0 0.0
    %1067 = vmatprep.subr.mxu0 0.0
    %1068 = vmatpush1.msra.mxu0 0.0
    %1069 = vmatprep.subr.mxu0 0.0
    %1070 = vmatpush1.msra.mxu0 0.0
    %1071 = vmatprep.subr.mxu0 0.0
    %1072 = vmatpush1.msra.mxu0 0.0
    %1073 = vmatprep.subr.mxu0 0.0
    %1074 = vmatpush1.msra.mxu0 0.0
    %1075 = vmatprep.subr.mxu0 0.0
    %1076 = vmatpush1.msra.mxu0 0.0
    %1077 = vmatprep.subr.mxu0 0.0
    %1078 = vmatpush1.msra.mxu0 0.0
    %1079 = vmatprep.mubr.f32.mxu0 0.0
    %1080 = vmatmul.mubr.f32.gmra.mrb[0].mxu0 %v991
    %v1081 = vpop.f32.mrb[0].mxu0
    %v1082 = vadd.f32 %v1013, %v1081
    %v1083 = vpop.f32.mrb[0].mxu0
    %1084 = vdwg.mxu0
    %1085 = vst [vmem:[#allocation8] sm:$0xff] %v1082
    // Predicated region
    $region42: #{tpu_custom_call.1} parent=1 // pred_check
      _
    $region43: #{tpu_custom_call.1} parent=1 // pred_check_branch
      %1087 = sbr.rel (0) target = $region45
    $region44: #{tpu_custom_call.1} parent=1 // pred_region
      %s1089 = ssub.s32 128, 128
      %1090 = vsyncadd [#allocation4], %s1089
      %s1092 = sshll.u32 [#allocation8], 4
      %s1093 = int_to_ptr.vmem [resolvable:$true] %s1092
      %1095 = dma.vmem_to_hbm [thread:$0]  %s1093, 128, %s7, [#allocation4]
    $region45: #{tpu_custom_call.1} parent=1 // pred_fallthru
      _
    // Predicated region
    $region46: #{tpu_custom_call.1} parent=1 // pred_check
      _
    $region47: #{tpu_custom_call.1} parent=1 // pred_check_branch
      %1097 = sbr.rel (0) target = $region49
    $region48: #{tpu_custom_call.1} parent=1 // pred_region
      %1098 = dma.done [#allocation4], 128
    $region49: #{tpu_custom_call.1} parent=1 // pred_fallthru
      _
    %1099 = vsyncpa [#allocation3], 1
    %1100 = vsyncpa [#allocation6], 1
    %1101 = vsyncpa [#allocation4], 1

</llo_original>
